<compile_context>
chip_gen: v5e
topology: v5e:2x2
jax: 0.10.0
libtpu: 0.0.40
codegen_flags: <defaults>
</compile_context>

<pallas_src>
import jax
import jax.numpy as jnp
from jax.experimental import pallas as pl
from jax.experimental.pallas import tpu as pltpu

EPS = 1e-5  # RevIN eps


def _round_up(x, m):
    return ((x + m - 1) // m) * m


# --------------------------------------------------------------------------
# Fused kernel: RevIN norm -> (folded) patch+linear head -> RevIN denorm
# Operates on channel-major rows: each row is one (batch, channel) series.
# --------------------------------------------------------------------------
def _fused_rose_kernel(x_ref, w_ref, b_ref, invw_ref, hw_ref, hb_ref, o_ref):
    x = x_ref[...].astype(jnp.float32)                         # (Mt, S)
    inv_s = 1.0 / x.shape[1]

    # RevIN statistics over the time (lane) axis: two-pass mean / var
    # (unbiased=False), matching torch semantics and better conditioned than
    # the E[x^2]-E[x]^2 form.
    mean = jnp.sum(x, axis=1, keepdims=True) * inv_s           # (Mt, 1)
    diff = x - mean
    var = jnp.sum(diff * diff, axis=1, keepdims=True) * inv_s  # (Mt, 1)
    inv_std = jax.lax.rsqrt(var + EPS)                         # EUP, no divide
    std = (var + EPS) * inv_std                                # sqrt(var + eps)

    # RevIN 'norm' + per-channel affine (per-row weight/bias, bcast over time).
    xn = diff * inv_std * w_ref[...] + b_ref[...]              # (Mt, S)

    # Patch-unfold + flatten -> linear head, pre-folded into hw_ref (S, N_pad):
    # a single lane-dense MXU matmul, exactly equal to unfold->concat->matmul.
    pred = jnp.dot(xn, hw_ref[...], preferred_element_type=jnp.float32)
    pred = pred + hb_ref[...]                                  # (Mt, N_pad)

    # RevIN 'denorm': (pred - bias) / (weight + eps^2) * std + mean
    scale = invw_ref[...] * std                                # (Mt, 1)
    o_ref[...] = ((pred - b_ref[...]) * scale + mean).astype(o_ref.dtype)


# --------------------------------------------------------------------------
# RoseModel.forward wrapper
# --------------------------------------------------------------------------
def rose_forward(inputs, params, *, patch_len, stride, pred_len, row_tile=256):
    """inputs: [B, seq_len, n_vars] -> (output [B, pred_len, n_vars], xe, xq)"""
    B, S, K = inputs.shape
    # TODO(synk): torch slicing with s_begin < 0 (seq_len < patch_len) is
    # ill-defined in the reference; require seq_len >= patch_len.
    assert S >= patch_len, "seq_len < patch_len not supported"

    num_patch = (max(S, patch_len) - patch_len) // stride + 1
    tgt_len = patch_len + stride * (num_patch - 1)
    s_begin = S - tgt_len
    P = num_patch * patch_len

    M = B * K
    Mt = min(_round_up(M, 8), _round_up(row_tile, 8))          # rows per grid step
    M_pad = _round_up(M, Mt)
    N_pad = _round_up(pred_len, 128)                           # lane-dense output
    out_dtype = inputs.dtype

    # Channel-major: single transpose at the boundary; no mid-pipeline gathers.
    x_ck = jnp.transpose(inputs, (0, 2, 1)).reshape(M, S)
    if M_pad != M:
        x_ck = jnp.pad(x_ck, ((0, M_pad - M), (0, 0)))

    w = params["affine_weight"].astype(jnp.float32)            # (K,)
    b = params["affine_bias"].astype(jnp.float32)              # (K,)
    w_rows = jnp.tile(w, B).reshape(M, 1)                      # row r -> channel r%K
    b_rows = jnp.tile(b, B).reshape(M, 1)
    invw_rows = 1.0 / (w_rows + EPS * EPS)                     # hoisted reciprocal
    if M_pad != M:
        pad = ((0, M_pad - M), (0, 0))
        w_rows = jnp.pad(w_rows, pad, constant_values=1.0)
        b_rows = jnp.pad(b_rows, pad)
        invw_rows = jnp.pad(invw_rows, pad, constant_values=1.0)

    hw = params["head_w"].astype(jnp.float32)                  # (P, pred_len)
    hb = params["head_b"].astype(jnp.float32)                  # (pred_len,)
    hw_pad = jnp.pad(hw, ((0, 0), (0, N_pad - pred_len)))      # (P, N_pad)
    hb_pad = jnp.pad(hb, (0, N_pad - pred_len)).reshape(1, N_pad)

    # Fold unfold + flatten into a (S, N_pad) weight: scatter-add each head
    # row onto the time position it reads.  Overlapping patches (stride <
    # patch_len) produce duplicate indices which .add accumulates -> exact.
    t_idx = (s_begin
             + jnp.arange(num_patch)[:, None] * stride
             + jnp.arange(patch_len)[None, :]).reshape(-1)     # (P,)
    w_eff = jnp.zeros((S, N_pad), jnp.float32).at[t_idx].add(hw_pad)

    out = pl.pallas_call(
        _fused_rose_kernel,
        out_shape=jax.ShapeDtypeStruct((M_pad, N_pad), jnp.float32),
        grid=(M_pad // Mt,),
        in_specs=[
            pl.BlockSpec((Mt, S), lambda i: (i, 0)),           # x rows
            pl.BlockSpec((Mt, 1), lambda i: (i, 0)),           # affine weight rows
            pl.BlockSpec((Mt, 1), lambda i: (i, 0)),           # affine bias rows
            pl.BlockSpec((Mt, 1), lambda i: (i, 0)),           # 1/(w + eps^2) rows
            pl.BlockSpec((S, N_pad), lambda i: (0, 0)),        # folded head weight
            pl.BlockSpec((1, N_pad), lambda i: (0, 0)),        # head bias (shared)
        ],
        out_specs=pl.BlockSpec((Mt, N_pad), lambda i: (i, 0)),
        compiler_params=pltpu.CompilerParams(
            dimension_semantics=("parallel",)),
    )(x_ck, w_rows, b_rows, invw_rows, w_eff, hb_pad)

    pred = out[:M, :pred_len].reshape(B, K, pred_len)
    output = jnp.transpose(pred, (0, 2, 1)).astype(out_dtype)  # [B, pred_len, K]
    xe = jnp.zeros((), jnp.float32)
    xq = jnp.zeros((), jnp.float32)
    return output, xe, xq


if __name__ == "__main__":
    # Small, forward-consistent shapes
    B, S, K = 2, 16, 4                # batch, seq_len, enc_in (n_vars)
    patch_len, stride = 8, 4
    pred_len = 96                     # prediction_length in {96, 192, 336, 720}
    num_patch = (max(S, patch_len) - patch_len) // stride + 1   # = 3

    key = jax.random.PRNGKey(0)
    k_in, k_w = jax.random.split(key)
    inputs = jax.random.normal(k_in, (B, S, K), dtype=jnp.float32)

    # Deterministic parameter init (RevIN affine: ones/zeros per __init__)
    params = {
        "affine_weight": jnp.ones((K,), jnp.float32),
        "affine_bias": jnp.zeros((K,), jnp.float32),
        "head_w": 0.02 * jax.random.normal(
            k_w, (num_patch * patch_len, pred_len), jnp.float32),
        "head_b": jnp.zeros((pred_len,), jnp.float32),
    }

    out, xe, xq = rose_forward(
        inputs, params, patch_len=patch_len, stride=stride, pred_len=pred_len)
    jax.block_until_ready(out)
    assert out.shape == (B, pred_len, K), out.shape

    # Plain-JAX reference of the same forward (RevIN norm -> unfold -> head -> denorm)
    def ref(x):
        mean = jnp.mean(x, axis=1, keepdims=True)
        var = jnp.mean((x - mean) ** 2, axis=1, keepdims=True)
        std = jnp.sqrt(var + EPS)
        xn = (x - mean) / std * params["affine_weight"] + params["affine_bias"]
        tgt_len = patch_len + stride * (num_patch - 1)
        xs = xn[:, S - tgt_len:, :]
        idx = jnp.arange(num_patch)[:, None] * stride + jnp.arange(patch_len)[None, :]
        patches = xs[:, idx, :]                                # (B, np, pl, K)
        patches = jnp.transpose(patches, (0, 3, 1, 2))         # (B, K, np, pl)
        z = patches.reshape(B * K, num_patch * patch_len)
        pred = z @ params["head_w"] + params["head_b"]
        pred = pred.reshape(B, K, pred_len).transpose(0, 2, 1)
        return (pred - params["affine_bias"]) / (params["affine_weight"] + EPS * EPS) * std + mean

    r = ref(inputs)
    assert jnp.allclose(out, r, atol=1e-4, rtol=1e-4), float(jnp.max(jnp.abs(out - r)))
    print("KERNEL_OK")
</pallas_src>

<mosaic_0001>
module attributes {stable_mosaic.version = 11 : i64} {
  func.func @_fused_rose_kernel(%arg0: i32, %arg1: memref<8x16xf32, #tpu.memory_space<vmem>>, %arg2: memref<8x1xf32, #tpu.memory_space<vmem>>, %arg3: memref<8x1xf32, #tpu.memory_space<vmem>>, %arg4: memref<8x1xf32, #tpu.memory_space<vmem>>, %arg5: memref<16x128xf32, #tpu.memory_space<vmem>>, %arg6: memref<1x128xf32, #tpu.memory_space<vmem>>, %arg7: memref<8x128xf32, #tpu.memory_space<vmem>>) attributes {dimension_semantics = [#tpu.dimension_semantics<parallel>], iteration_bounds = array<i64: 1>, scalar_prefetch = 0 : i64, scratch_operands = 0 : i64, tpu.core_type = #tpu.core_type<tc>, window_params = [{transform_indices = @transform_0, window_bounds = array<i64: 8, 16>}, {transform_indices = @transform_1, window_bounds = array<i64: 8, 1>}, {transform_indices = @transform_2, window_bounds = array<i64: 8, 1>}, {transform_indices = @transform_3, window_bounds = array<i64: 8, 1>}, {pipeline_mode = #tpu.pipeline_mode<synchronous>, transform_indices = @transform_4, window_bounds = array<i64: 16, 128>}, {pipeline_mode = #tpu.pipeline_mode<synchronous>, transform_indices = @transform_5, window_bounds = array<i64: 1, 128>}, {transform_indices = @transform_6, window_bounds = array<i64: 8, 128>}]} {
    %c0 = arith.constant 0 : index
    %c0_0 = arith.constant 0 : index
    %0 = vector.load %arg1[%c0, %c0_0] : memref<8x16xf32, #tpu.memory_space<vmem>>, vector<8x16xf32>
    %cst = arith.constant dense<0.000000e+00> : vector<8xf32>
    %1 = vector.multi_reduction <add>, %0, %cst [1] : vector<8x16xf32> to vector<8xf32>
    %2 = vector.shape_cast %1 : vector<8xf32> to vector<8x1xf32>
    %cst_1 = arith.constant 6.250000e-02 : f32
    %3 = vector.broadcast %cst_1 : f32 to vector<8x1xf32>
    %4 = arith.mulf %2, %3 : vector<8x1xf32>
    %5 = vector.broadcast %4 : vector<8x1xf32> to vector<8x16xf32>
    %6 = arith.subf %0, %5 : vector<8x16xf32>
    %7 = arith.mulf %6, %6 : vector<8x16xf32>
    %cst_2 = arith.constant dense<0.000000e+00> : vector<8xf32>
    %8 = vector.multi_reduction <add>, %7, %cst_2 [1] : vector<8x16xf32> to vector<8xf32>
    %9 = vector.shape_cast %8 : vector<8xf32> to vector<8x1xf32>
    %cst_3 = arith.constant 6.250000e-02 : f32
    %10 = vector.broadcast %cst_3 : f32 to vector<8x1xf32>
    %11 = arith.mulf %9, %10 : vector<8x1xf32>
    %cst_4 = arith.constant 9.99999974E-6 : f32
    %12 = vector.broadcast %cst_4 : f32 to vector<8x1xf32>
    %13 = arith.addf %11, %12 : vector<8x1xf32>
    %14 = math.rsqrt %13 : vector<8x1xf32>
    %cst_5 = arith.constant 9.99999974E-6 : f32
    %15 = vector.broadcast %cst_5 : f32 to vector<8x1xf32>
    %16 = arith.addf %11, %15 : vector<8x1xf32>
    %17 = arith.mulf %16, %14 : vector<8x1xf32>
    %18 = vector.broadcast %14 : vector<8x1xf32> to vector<8x16xf32>
    %19 = arith.mulf %6, %18 : vector<8x16xf32>
    %c0_6 = arith.constant 0 : index
    %c0_7 = arith.constant 0 : index
    %20 = vector.load %arg2[%c0_6, %c0_7] : memref<8x1xf32, #tpu.memory_space<vmem>>, vector<8x1xf32>
    %21 = vector.broadcast %20 : vector<8x1xf32> to vector<8x16xf32>
    %22 = arith.mulf %19, %21 : vector<8x16xf32>
    %c0_8 = arith.constant 0 : index
    %c0_9 = arith.constant 0 : index
    %23 = vector.load %arg3[%c0_8, %c0_9] : memref<8x1xf32, #tpu.memory_space<vmem>>, vector<8x1xf32>
    %24 = vector.broadcast %23 : vector<8x1xf32> to vector<8x16xf32>
    %25 = arith.addf %22, %24 : vector<8x16xf32>
    %c0_10 = arith.constant 0 : index
    %c0_11 = arith.constant 0 : index
    %26 = vector.load %arg5[%c0_10, %c0_11] : memref<16x128xf32, #tpu.memory_space<vmem>>, vector<16x128xf32>
    %cst_12 = arith.constant dense<0.000000e+00> : vector<8x128xf32>
    %27 = tpu.matmul %25, %26, %cst_12 {dimension_numbers = #tpu.dot_dimension_numbers<[1], [0], [0], [1], [0, 0, 1, 1], [], []>} : vector<8x16xf32>, vector<16x128xf32>, vector<8x128xf32> -> vector<8x128xf32>
    %c0_13 = arith.constant 0 : index
    %c0_14 = arith.constant 0 : index
    %28 = vector.load %arg6[%c0_13, %c0_14] : memref<1x128xf32, #tpu.memory_space<vmem>>, vector<1x128xf32>
    %29 = vector.broadcast %28 : vector<1x128xf32> to vector<8x128xf32>
    %30 = arith.addf %27, %29 : vector<8x128xf32>
    %c0_15 = arith.constant 0 : index
    %c0_16 = arith.constant 0 : index
    %31 = vector.load %arg4[%c0_15, %c0_16] : memref<8x1xf32, #tpu.memory_space<vmem>>, vector<8x1xf32>
    %32 = arith.mulf %31, %17 : vector<8x1xf32>
    %c0_17 = arith.constant 0 : index
    %c0_18 = arith.constant 0 : index
    %33 = vector.load %arg3[%c0_17, %c0_18] : memref<8x1xf32, #tpu.memory_space<vmem>>, vector<8x1xf32>
    %34 = vector.broadcast %33 : vector<8x1xf32> to vector<8x128xf32>
    %35 = arith.subf %30, %34 : vector<8x128xf32>
    %36 = vector.broadcast %32 : vector<8x1xf32> to vector<8x128xf32>
    %37 = arith.mulf %35, %36 : vector<8x128xf32>
    %38 = vector.broadcast %4 : vector<8x1xf32> to vector<8x128xf32>
    %39 = arith.addf %37, %38 : vector<8x128xf32>
    %c0_19 = arith.constant 0 : index
    %c0_20 = arith.constant 0 : index
    %40 = vector.load %arg7[%c0_19, %c0_20] : memref<8x128xf32, #tpu.memory_space<vmem>>, vector<8x128xf32>
    tpu.vector_store %arg7[%c0_19, %c0_20], %39 {strides = array<i32>} : memref<8x128xf32, #tpu.memory_space<vmem>>, vector<8x128xf32>,
    return
  }
  func.func @transform_0(%arg0: i32) -> (i32, i32) {
    %c0_i32 = arith.constant 0 : i32
    %c0_i32_0 = arith.constant 0 : i32
    return %arg0, %c0_i32 : i32, i32
  }
  func.func @transform_1(%arg0: i32) -> (i32, i32) {
    %c0_i32 = arith.constant 0 : i32
    %c0_i32_0 = arith.constant 0 : i32
    return %arg0, %c0_i32 : i32, i32
  }
  func.func @transform_2(%arg0: i32) -> (i32, i32) {
    %c0_i32 = arith.constant 0 : i32
    %c0_i32_0 = arith.constant 0 : i32
    return %arg0, %c0_i32 : i32, i32
  }
  func.func @transform_3(%arg0: i32) -> (i32, i32) {
    %c0_i32 = arith.constant 0 : i32
    %c0_i32_0 = arith.constant 0 : i32
    return %arg0, %c0_i32 : i32, i32
  }
  func.func @transform_4(%arg0: i32) -> (i32, i32) {
    %c0_i32 = arith.constant 0 : i32
    %c0_i32_0 = arith.constant 0 : i32
    %c0_i32_1 = arith.constant 0 : i32
    return %c0_i32, %c0_i32_0 : i32, i32
  }
  func.func @transform_5(%arg0: i32) -> (i32, i32) {
    %c0_i32 = arith.constant 0 : i32
    %c0_i32_0 = arith.constant 0 : i32
    %c0_i32_1 = arith.constant 0 : i32
    return %c0_i32, %c0_i32_0 : i32, i32
  }
  func.func @transform_6(%arg0: i32) -> (i32, i32) {
    %c0_i32 = arith.constant 0 : i32
    %c0_i32_0 = arith.constant 0 : i32
    return %arg0, %c0_i32 : i32, i32
  }
}

</mosaic_0001>

<llo_original>
// kernel: tpu_custom_call.1
$region0: #{tpu_custom_call.1}
  #allocation0 [shape = 'u32[]', space=smem, size = 0x4, offset = 0x4, fixed_abs, tag = 'smem constant byte address 0x4 - core index']
  #allocation1 [shape = 'u32[72,128]{1,0:T(1,128)}', space=vmem, size = 0x9000, scoped, tag = 'internal scratch']
  %s0 = inlined_call_operand.vmem [shape: f32[8,16], index: 0, kind: input, shape index: {}]
  %s1 = inlined_call_operand.vmem [shape: f32[8,1], index: 1, kind: input, shape index: {}]
  %s2 = inlined_call_operand.vmem [shape: f32[8,1], index: 2, kind: input, shape index: {}]
  %s3 = inlined_call_operand.vmem [shape: f32[8,1], index: 3, kind: input, shape index: {}]
  %s4 = inlined_call_operand.vmem [shape: f32[16,128], index: 4, kind: input, shape index: {}]
  %s5 = inlined_call_operand.vmem [shape: f32[1,128], index: 5, kind: input, shape index: {}]
  %s6 = inlined_call_operand.hbm [shape: f32[8,128], index: 6, kind: output, shape index: {}]
  %s7 = sld [smem:[#allocation0]]
  $region34: #{tpu_custom_call.1} parent=0
    _
  %s9 = ssub.s32 1, %s7
  %s10 = scalar_select 0, %s9, %s7
  $region1: #{tpu_custom_call.1} parent=0
    #allocation2 [shape = 'u8[4096]{0}', space=vmem, size = 0x1000, scoped, tag = 'output window, operand 0, single buffered']
    #allocation3 [shape = 's32[1]{0}', space=sflag, size = 0x4, scoped, tag = 'scoped memory for tpu_custom_call.1']
    %11 = vsyncpa [#allocation3], 0
    // Predicated region
    $region2: #{tpu_custom_call.1} parent=1 // pred_check
      _
    $region3: #{tpu_custom_call.1} parent=1 // pred_check_branch
      %13 = sbr.rel (0) target = $region5
    $region4: #{tpu_custom_call.1} parent=1 // pred_region
      _
    $region5: #{tpu_custom_call.1} parent=1 // pred_fallthru
      _
    // Predicated region
    $region6: #{tpu_custom_call.1} parent=1 // pred_check
      _
    $region7: #{tpu_custom_call.1} parent=1 // pred_check_branch
      %15 = sbr.rel (0) target = $region9
    $region8: #{tpu_custom_call.1} parent=1 // pred_region
      _
    $region9: #{tpu_custom_call.1} parent=1 // pred_fallthru
      _
    // Predicated region
    $region10: #{tpu_custom_call.1} parent=1 // pred_check
      _
    $region11: #{tpu_custom_call.1} parent=1 // pred_check_branch
      %17 = sbr.rel (0) target = $region13
    $region12: #{tpu_custom_call.1} parent=1 // pred_region
      _
    $region13: #{tpu_custom_call.1} parent=1 // pred_fallthru
      _
    // Predicated region
    $region14: #{tpu_custom_call.1} parent=1 // pred_check
      _
    $region15: #{tpu_custom_call.1} parent=1 // pred_check_branch
      %19 = sbr.rel (0) target = $region17
    $region16: #{tpu_custom_call.1} parent=1 // pred_region
      _
    $region17: #{tpu_custom_call.1} parent=1 // pred_fallthru
      _
    // Predicated region
    $region18: #{tpu_custom_call.1} parent=1 // pred_check
      _
    $region19: #{tpu_custom_call.1} parent=1 // pred_check_branch
      %21 = sbr.rel (0) target = $region21
    $region20: #{tpu_custom_call.1} parent=1 // pred_region
      _
    $region21: #{tpu_custom_call.1} parent=1 // pred_fallthru
      _
    // Predicated region
    $region22: #{tpu_custom_call.1} parent=1 // pred_check
      _
    $region23: #{tpu_custom_call.1} parent=1 // pred_check_branch
      %23 = sbr.rel (0) target = $region25
    $region24: #{tpu_custom_call.1} parent=1 // pred_region
      _
    $region25: #{tpu_custom_call.1} parent=1 // pred_fallthru
      _
    %v24 = vld [vmem:[%s0] sm:$0xff]
    %vm25 = vcmask 130048
    %v26 = vsel %vm25, %v24, 0.0
    %27 = vadd.xlane.f32.xlu0 %v26
    %v28 = vpop.xlane.xlu0 %27
    %v29 = vmul.f32 %v28, 0.0625
    %v30 = vsub.f32 %v24, %v29
    %v31 = vmul.f32 %v30, %v30
    %v32 = vsel %vm25, %v31, 0.0
    %33 = vadd.xlane.f32.xlu0 %v32
    %v34 = vpop.xlane.xlu0 %33
    %v35 = vmul.f32 %v34, 0.0625
    %v36 = vadd.f32 %v35, 1e-05
    %v37 = vrsqrt.pop %v36
    %v38 = vmul.f32 %v37, %v36
    %v39 = vmul.f32 %v38, %v37
    %v40 = vmul.f32 0.5, %v39
    %v41 = vsub.f32 1.5, %v40
    %v42 = vmul.f32 %v37, %v41
    %vm43 = vweird.f32 %v36
    %vm44 = vweird.f32 %v37
    %vm45 = vmor %vm43, %vm44
    %v46 = vsel %vm45, %v37, %v42
    %v47 = vmul.f32 %v36, %v46
    %v48 = vmul.f32 %v30, %v46
    %v49 = vld [vmem:[%s1] sm:$0xff]
    %51 = vset.pattern.permute.xlu0 0
    %52 = vperm.xlu0 %51, %v49
    %v53 = vpop.permute.xlu0 %52
    %v55 = vmul.f32 %v48, %v53
    %v56 = vld [vmem:[%s2] sm:$0xff]
    %58 = vset.pattern.permute.xlu0 0
    %59 = vperm.xlu0 %58, %v56
    %v60 = vpop.permute.xlu0 %59
    %v62 = vadd.f32 %v55, %v60
    %v63 = vld [vmem:[%s4] sm:$0xff]
    %v64 = vld [vmem:[%s4 + $0x8] sm:$0xff]
    %v65 = vld [vmem:[%s5] sm:$0x1]
    %v67 = vperm.slane %v65, 0
    %v70 = vsel %vm25, %v62, 0
    %72 = vmatpush.msra.mxu0 0.0
    %73 = vmatpush.msra.mxu0 0.0
    %74 = vmatpush.msra.mxu0 0.0
    %75 = vmatpush.msra.mxu0 0.0
    %76 = vmatpush.msra.mxu0 0.0
    %77 = vmatpush.msra.mxu0 0.0
    %78 = vmatpush.msra.mxu0 0.0
    %79 = vmatpush.msra.mxu0 0.0
    %80 = vmatpush.msra.mxu0 0.0
    %81 = vmatpush.msra.mxu0 0.0
    %82 = vmatpush.msra.mxu0 0.0
    %83 = vmatpush.msra.mxu0 0.0
    %84 = vmatpush.msra.mxu0 0.0
    %85 = vmatpush.msra.mxu0 0.0
    %86 = vmatpush.msra.mxu0 %v64
    %87 = vmatpush.msra.mxu0 %v63
    %88 = vmatmul.f32.gmra.mxu0 %v70
    %v89 = vpop.f32.mrf.mxu0
    %v90 = vadd.f32 %v67, %v89
    %91 = vdwg.mxu0
    %v92 = vld [vmem:[%s3] sm:$0xff]
    %v93 = vmul.f32 %v92, %v47
    %v94 = vsub.f32 %v90, %v60
    %96 = vset.pattern.permute.xlu0 0
    %97 = vperm.xlu0 %96, %v93
    %v98 = vpop.permute.xlu0 %97
    %v100 = vmul.f32 %v94, %v98
    %v101 = vadd.f32 %v100, %v29
    %102 = vst [vmem:[#allocation2] sm:$0xff] %v101
    // Predicated region
    $region26: #{tpu_custom_call.1} parent=1 // pred_check
      _
    $region27: #{tpu_custom_call.1} parent=1 // pred_check_branch
      %104 = sbr.rel (0) target = $region29
    $region28: #{tpu_custom_call.1} parent=1 // pred_region
      %106 = vsyncadd [#allocation3], 0
      %s108 = sshll.u32 [#allocation2], 4
      %s109 = int_to_ptr.vmem [resolvable:$true] %s108
      %s110 = sshll.u32 %s6, 4
      %s111 = int_to_ptr.hbm [resolvable:$true] %s110
      %113 = dma.vmem_to_hbm [thread:$0]  %s109, 128, %s111, [#allocation3]
    $region29: #{tpu_custom_call.1} parent=1 // pred_fallthru
      _
    // Predicated region
    $region30: #{tpu_custom_call.1} parent=1 // pred_check
      _
    $region31: #{tpu_custom_call.1} parent=1 // pred_check_branch
      %115 = sbr.rel (0) target = $region33
    $region32: #{tpu_custom_call.1} parent=1 // pred_region
      %117 = dma.done [#allocation3], 128
    $region33: #{tpu_custom_call.1} parent=1 // pred_fallthru
      _
    %118 = vsyncpa [#allocation3], 1

</llo_original>
